<compile_context>
chip_gen: v6e
topology: v6e:2x2x1
jax: 0.10.0
libtpu: 0.0.40
codegen_flags: <defaults>
</compile_context>

<pallas_src>
import math
import jax
import jax.numpy as jnp
from jax.experimental import pallas as pl
from jax.experimental.pallas import tpu as pltpu


# ---------------------------------------------------------------------------
# Kernels
# ---------------------------------------------------------------------------

def _decay_matmul_kernel(d_ref, wt_ref, b_ref, o_ref):
    # d_ref:  (tb, I)   batch tile of deltas
    # wt_ref: (I,  O)   resident weight, pre-transposed (grid-invariant)
    # b_ref:  (1,  O)   resident bias row (f32)
    # o_ref:  (tb, O)   output tile
    x = jnp.dot(d_ref[...], wt_ref[...], preferred_element_type=jnp.float32)
    x = x + b_ref[...]                                   # f32 epilogue
    o_ref[...] = jnp.exp(-jnp.maximum(x, 0.0)).astype(o_ref.dtype)


def _decay_diag_kernel(d_ref, w_ref, b_ref, o_ref):
    # diag=True path: per-lane scale with diag(W); no MXU, no IxI weight DMA.
    x = d_ref[...].astype(jnp.float32) * w_ref[...] + b_ref[...]
    o_ref[...] = jnp.exp(-jnp.maximum(x, 0.0)).astype(o_ref.dtype)


# ---------------------------------------------------------------------------
# Tiling / VMEM helpers
# ---------------------------------------------------------------------------

def _round_up(x, m):
    return ((x + m - 1) // m) * m


def _physical_vmem_bytes():
    try:
        return int(pltpu.get_tpu_info().vmem_capacity_bytes)
    except Exception:
        return 64 << 20          # conservative fallback: v7x per-TC VMEM


def _pick_tile_b(B, row_bytes, budget_bytes, *, sub=8, max_tile=8192):
    """Largest batch tile whose double-buffered d+out footprint fits `budget`,
    capped so the 'parallel' batch axis has >=4 steps (>=2 per v7x core)."""
    by_vmem = max((budget_bytes // max(row_bytes, 1)) // sub * sub, sub)
    tb = min(max_tile, by_vmem, _round_up(B, sub))
    if B >= 4 * sub:
        tb = min(tb, _round_up(pl.cdiv(B, 4), sub))
    return max(tb, sub)


def _resident_spec(block_shape, index_map, single_buffer):
    """BlockSpec for grid-invariant operands (constant index map).

    With single_buffer=True we request one VMEM buffer instead of the default
    two — matters when I*O is large (frees VMEM for bigger batch tiles)."""
    if single_buffer:
        return pl.BlockSpec(block_shape, index_map, pipeline_mode=pl.Buffered(1))
    return pl.BlockSpec(block_shape, index_map)


# ---------------------------------------------------------------------------
# Parameter prep (hoistable) + pallas_call driver
# ---------------------------------------------------------------------------

def prepare_temporal_decay_params(W, b, *, diag=False, param_dtype=None):
    """One-time parameter prep: transpose / diag extraction / bias row.
    Hoist this out of RNN step loops (see make_temporal_decay)."""
    O, I = W.shape
    if diag:
        assert I == O, "diag=True requires input_size == output_size"
        w = jnp.diagonal(W).reshape(1, I).astype(jnp.float32)
    else:
        pdt = jnp.dtype(param_dtype) if param_dtype is not None else W.dtype
        w = W.T.astype(pdt)                              # [I, O] so hot path is d @ Wt
    b_row = b.reshape(1, O).astype(jnp.float32)
    return w, b_row


def _temporal_decay_call(d, w_prep, b_row, *, diag, out_dtype):
    B, I = d.shape
    O = b_row.shape[1]
    it_in = jnp.dtype(d.dtype).itemsize
    it_out = jnp.dtype(out_dtype).itemsize

    # Generation-aware VMEM budget (128 MiB on v5e/v6e, 64 MiB on v7x),
    # with headroom for compiler scratch / semaphores.
    usable = max(_physical_vmem_bytes() - (8 << 20), 16 << 20)

    if diag:
        resident = 2 * (2 * I * 4)                       # w_row + b_row (worst case x2)
    else:
        resident = 2 * (I * O * it_in + O * 4)           # Wt + bias (worst case x2)
    # NOTE: for very large I*O (resident Wt approaching ~half of VMEM) a second
    # grid axis over O (column-tiled Wt) should be added; not needed here.

    # Double-buffered streamed bytes per batch row (d in + gamma out).
    row_bytes = 2 * (I * it_in) + 2 * (O * it_out)
    sub = 16 if (it_in < 4 or it_out < 4) else 8         # sub-32-bit sublane packing
    tile_budget = max(int(0.75 * (usable - resident)), 1 << 20)
    tile_b = _pick_tile_b(B, row_bytes, tile_budget, sub=sub)
    grid = (pl.cdiv(B, tile_b),)                         # partial last block OK

    footprint = resident + tile_b * row_bytes
    vmem_limit = int(min(usable, max(footprint + (8 << 20), 32 << 20)))

    kernel = _decay_diag_kernel if diag else _decay_matmul_kernel
    w_shape = (1, I) if diag else (I, O)

    def run(single_buffer_weights):
        return pl.pallas_call(
            kernel,
            out_shape=jax.ShapeDtypeStruct((B, O), out_dtype),
            grid_spec=pltpu.PrefetchScalarGridSpec(
                num_scalar_prefetch=0,
                grid=grid,
                in_specs=[
                    pl.BlockSpec((tile_b, I), lambda i: (i, 0)),            # d tile
                    _resident_spec(w_shape, lambda i: (0, 0),
                                   single_buffer_weights),                  # weight
                    _resident_spec((1, O), lambda i: (0, 0),
                                   single_buffer_weights),                  # bias
                ],
                out_specs=pl.BlockSpec((tile_b, O), lambda i: (i, 0)),
            ),
            compiler_params=pltpu.CompilerParams(
                dimension_semantics=("parallel",),
                vmem_limit_bytes=vmem_limit),
        )(d, w_prep, b_row)

    try:
        return run(True)
    except Exception:
        # Older jax without BlockSpec(pipeline_mode=pl.Buffered(1)): identical
        # semantics with default double-buffered weights.
        return run(False)


def temporal_decay(d, W, b, *, diag=False, out_dtype=None):
    """gamma = exp(-relu(d @ W.T + b)), optionally with diagonal-masked W."""
    B, I = d.shape
    O, I2 = W.shape
    assert I == I2
    odt = jnp.dtype(out_dtype) if out_dtype is not None else jnp.dtype(d.dtype)
    w_prep, b_row = prepare_temporal_decay_params(W, b, diag=diag, param_dtype=d.dtype)
    return _temporal_decay_call(d, w_prep, b_row, diag=diag, out_dtype=odt)


def make_temporal_decay(W, b, *, diag=False, in_dtype=jnp.float32, out_dtype=None):
    """Hoists parameter prep out of the hot path; returns d -> gamma."""
    w_prep, b_row = prepare_temporal_decay_params(W, b, diag=diag, param_dtype=in_dtype)
    odt = jnp.dtype(out_dtype) if out_dtype is not None else jnp.dtype(in_dtype)

    def apply(d):
        return _temporal_decay_call(d, w_prep, b_row, diag=diag, out_dtype=odt)

    return apply


# ---------------------------------------------------------------------------
# Reference & test
# ---------------------------------------------------------------------------

def _init_params(key, input_size, output_size, dtype=jnp.float32):
    # Matches TemporalDecay.reset_parameters: uniform(-stdv, stdv), stdv=1/sqrt(O)
    stdv = 1.0 / math.sqrt(output_size)
    kw, kb = jax.random.split(key)
    W = jax.random.uniform(kw, (output_size, input_size), dtype, -stdv, stdv)
    b = jax.random.uniform(kb, (output_size,), dtype, -stdv, stdv)
    return W, b


def _reference(d, W, b, diag):
    Wm = W * jnp.eye(W.shape[0], dtype=W.dtype) if diag else W
    return jnp.exp(-jnp.maximum(d @ Wm.T + b, 0.0))


if __name__ == "__main__":
    key = jax.random.PRNGKey(0)
    k_d, k_d2, k_d3, k_p1, k_p2 = jax.random.split(key, 5)

    batch, input_size, output_size = 16, 32, 32
    d = jax.random.uniform(k_d, (batch, input_size), jnp.float32, 0.0, 2.0)

    # diag=False (MXU path, f32)
    W0, b0 = _init_params(k_p1, input_size, output_size)
    out0 = jax.block_until_ready(temporal_decay(d, W0, b0, diag=False))
    ref0 = _reference(d, W0, b0, diag=False)
    assert out0.shape == (batch, output_size)
    assert jnp.allclose(out0, ref0, atol=1e-5, rtol=1e-5)

    # diag=True (VPU-only path)
    W1, b1 = _init_params(k_p2, input_size, output_size)
    out1 = jax.block_until_ready(temporal_decay(d, W1, b1, diag=True))
    ref1 = _reference(d, W1, b1, diag=True)
    assert out1.shape == (batch, output_size)
    assert jnp.allclose(out1, ref1, atol=1e-5, rtol=1e-5)

    # ragged batch: partial last block, no wrapper-side pad / slice passes
    d13 = jax.random.uniform(k_d2, (13, input_size), jnp.float32, 0.0, 2.0)
    out2 = jax.block_until_ready(temporal_decay(d13, W0, b0, diag=False))
    ref2 = _reference(d13, W0, b0, diag=False)
    assert out2.shape == (13, output_size)
    assert jnp.allclose(out2, ref2, atol=1e-5, rtol=1e-5)

    # multi-step grid (>=2 steps per v7x core) + hoisted prep + bf16 output
    d_big = jax.random.uniform(k_d3, (1000, input_size), jnp.float32, 0.0, 2.0)
    decay_fn = make_temporal_decay(W0, b0, diag=False,
                                   in_dtype=jnp.float32, out_dtype=jnp.bfloat16)
    out3 = jax.block_until_ready(decay_fn(d_big))
    ref3 = _reference(d_big, W0, b0, diag=False)
    assert out3.shape == (1000, output_size)
    assert jnp.allclose(out3.astype(jnp.float32), ref3, atol=2e-2, rtol=2e-2)

    print("KERNEL_OK")
</pallas_src>

<mosaic_0001>
module attributes {stable_mosaic.version = 11 : i64} {
  func.func @_decay_matmul_kernel(%arg0: i32, %arg1: memref<16x32xf32, #tpu.memory_space<vmem>>, %arg2: memref<32x32xf32, #tpu.memory_space<vmem>>, %arg3: memref<1x32xf32, #tpu.memory_space<vmem>>, %arg4: memref<16x32xf32, #tpu.memory_space<vmem>>) attributes {dimension_semantics = [#tpu.dimension_semantics<parallel>], iteration_bounds = array<i64: 1>, scalar_prefetch = 0 : i64, scratch_operands = 0 : i64, tpu.core_type = #tpu.core_type<tc>, window_params = [{transform_indices = @transform_0, window_bounds = array<i64: 16, 32>}, {pipeline_mode = #tpu.pipeline_mode<synchronous>, transform_indices = @transform_1, window_bounds = array<i64: 32, 32>}, {pipeline_mode = #tpu.pipeline_mode<synchronous>, transform_indices = @transform_2, window_bounds = array<i64: 1, 32>}, {transform_indices = @transform_3, window_bounds = array<i64: 16, 32>}]} {
    %c0 = arith.constant 0 : index
    %c0_0 = arith.constant 0 : index
    %0 = vector.load %arg1[%c0, %c0_0] : memref<16x32xf32, #tpu.memory_space<vmem>>, vector<16x32xf32>
    %c0_1 = arith.constant 0 : index
    %c0_2 = arith.constant 0 : index
    %1 = vector.load %arg2[%c0_1, %c0_2] : memref<32x32xf32, #tpu.memory_space<vmem>>, vector<32x32xf32>
    %cst = arith.constant dense<0.000000e+00> : vector<16x32xf32>
    %2 = tpu.matmul %0, %1, %cst {dimension_numbers = #tpu.dot_dimension_numbers<[1], [0], [0], [1], [0, 0, 1, 1], [], []>} : vector<16x32xf32>, vector<32x32xf32>, vector<16x32xf32> -> vector<16x32xf32>
    %c0_3 = arith.constant 0 : index
    %c0_4 = arith.constant 0 : index
    %3 = vector.load %arg3[%c0_3, %c0_4] : memref<1x32xf32, #tpu.memory_space<vmem>>, vector<1x32xf32>
    %4 = vector.broadcast %3 : vector<1x32xf32> to vector<16x32xf32>
    %5 = arith.addf %2, %4 : vector<16x32xf32>
    %cst_5 = arith.constant 0.000000e+00 : f32
    %6 = vector.broadcast %cst_5 : f32 to vector<16x32xf32>
    %7 = arith.maximumf %5, %6 : vector<16x32xf32>
    %cst_6 = arith.constant 0.000000e+00 : f32
    %8 = vector.broadcast %cst_6 : f32 to vector<16x32xf32>
    %9 = arith.subf %8, %7 : vector<16x32xf32>
    %10 = math.exp %9 : vector<16x32xf32>
    %c0_7 = arith.constant 0 : index
    %c0_8 = arith.constant 0 : index
    %11 = vector.load %arg4[%c0_7, %c0_8] : memref<16x32xf32, #tpu.memory_space<vmem>>, vector<16x32xf32>
    tpu.vector_store %arg4[%c0_7, %c0_8], %10 {strides = array<i32>} : memref<16x32xf32, #tpu.memory_space<vmem>>, vector<16x32xf32>,
    return
  }
  func.func @transform_0(%arg0: i32) -> (i32, i32) {
    %c0_i32 = arith.constant 0 : i32
    %c0_i32_0 = arith.constant 0 : i32
    return %arg0, %c0_i32 : i32, i32
  }
  func.func @transform_1(%arg0: i32) -> (i32, i32) {
    %c0_i32 = arith.constant 0 : i32
    %c0_i32_0 = arith.constant 0 : i32
    %c0_i32_1 = arith.constant 0 : i32
    return %c0_i32, %c0_i32_0 : i32, i32
  }
  func.func @transform_2(%arg0: i32) -> (i32, i32) {
    %c0_i32 = arith.constant 0 : i32
    %c0_i32_0 = arith.constant 0 : i32
    %c0_i32_1 = arith.constant 0 : i32
    return %c0_i32, %c0_i32_0 : i32, i32
  }
  func.func @transform_3(%arg0: i32) -> (i32, i32) {
    %c0_i32 = arith.constant 0 : i32
    %c0_i32_0 = arith.constant 0 : i32
    return %arg0, %c0_i32 : i32, i32
  }
}

module attributes {stable_mosaic.version = 11 : i64} {
  func.func @_decay_matmul_kernel(%arg0: i32, %arg1: memref<16x32xf32, #tpu.memory_space<vmem>>, %arg2: memref<32x32xf32, #tpu.memory_space<vmem>>, %arg3: memref<1x32xf32, #tpu.memory_space<vmem>>, %arg4: memref<16x32xf32, #tpu.memory_space<vmem>>) attributes {dimension_semantics = [#tpu.dimension_semantics<parallel>], iteration_bounds = array<i64: 1>, scalar_prefetch = 0 : i64, scratch_operands = 0 : i64, tpu.core_type = #tpu.core_type<tc>, window_params = [{transform_indices = @transform_0, window_bounds = array<i64: 16, 32>}, {pipeline_mode = #tpu.pipeline_mode<synchronous>, transform_indices = @transform_1, window_bounds = array<i64: 32, 32>}, {pipeline_mode = #tpu.pipeline_mode<synchronous>, transform_indices = @transform_2, window_bounds = array<i64: 1, 32>}, {transform_indices = @transform_3, window_bounds = array<i64: 16, 32>}]} {
    %c0 = arith.constant 0 : index
    %c0_0 = arith.constant 0 : index
    %0 = vector.load %arg1[%c0, %c0_0] : memref<16x32xf32, #tpu.memory_space<vmem>>, vector<16x32xf32>
    %c0_1 = arith.constant 0 : index
    %c0_2 = arith.constant 0 : index
    %1 = vector.load %arg2[%c0_1, %c0_2] : memref<32x32xf32, #tpu.memory_space<vmem>>, vector<32x32xf32>
    %cst = arith.constant dense<0.000000e+00> : vector<16x32xf32>
    %2 = tpu.matmul %0, %1, %cst {dimension_numbers = #tpu.dot_dimension_numbers<[1], [0], [0], [1], [0, 0, 1, 1], [], []>} : vector<16x32xf32>, vector<32x32xf32>, vector<16x32xf32> -> vector<16x32xf32>
    %c0_3 = arith.constant 0 : index
    %c0_4 = arith.constant 0 : index
    %3 = vector.load %arg3[%c0_3, %c0_4] : memref<1x32xf32, #tpu.memory_space<vmem>>, vector<1x32xf32>
    %4 = vector.broadcast %3 : vector<1x32xf32> to vector<16x32xf32>
    %5 = arith.addf %2, %4 : vector<16x32xf32>
    %cst_5 = arith.constant 0.000000e+00 : f32
    %6 = vector.broadcast %cst_5 : f32 to vector<16x32xf32>
    %7 = arith.maximumf %5, %6 : vector<16x32xf32>
    %cst_6 = arith.constant 0.000000e+00 : f32
    %8 = vector.broadcast %cst_6 : f32 to vector<16x32xf32>
    %9 = arith.subf %8, %7 : vector<16x32xf32>
    %10 = math.exp %9 : vector<16x32xf32>
    %c0_7 = arith.constant 0 : index
    %c0_8 = arith.constant 0 : index
    %11 = vector.load %arg4[%c0_7, %c0_8] : memref<16x32xf32, #tpu.memory_space<vmem>>, vector<16x32xf32>
    tpu.vector_store %arg4[%c0_7, %c0_8], %10 {strides = array<i32>} : memref<16x32xf32, #tpu.memory_space<vmem>>, vector<16x32xf32>,
    return
  }
  func.func @transform_0(%arg0: i32) -> (i32, i32) {
    %c0_i32 = arith.constant 0 : i32
    %c0_i32_0 = arith.constant 0 : i32
    return %arg0, %c0_i32 : i32, i32
  }
  func.func @transform_1(%arg0: i32) -> (i32, i32) {
    %c0_i32 = arith.constant 0 : i32
    %c0_i32_0 = arith.constant 0 : i32
    %c0_i32_1 = arith.constant 0 : i32
    return %c0_i32, %c0_i32_0 : i32, i32
  }
  func.func @transform_2(%arg0: i32) -> (i32, i32) {
    %c0_i32 = arith.constant 0 : i32
    %c0_i32_0 = arith.constant 0 : i32
    %c0_i32_1 = arith.constant 0 : i32
    return %c0_i32, %c0_i32_0 : i32, i32
  }
  func.func @transform_3(%arg0: i32) -> (i32, i32) {
    %c0_i32 = arith.constant 0 : i32
    %c0_i32_0 = arith.constant 0 : i32
    return %arg0, %c0_i32 : i32, i32
  }
}

</mosaic_0001>

<llo_original>
// kernel: tpu_custom_call.1
$region0: #{tpu_custom_call.1}
  #allocation0 [shape = 'u32[]', space=smem, size = 0x4, offset = 0x4, fixed_abs, tag = 'smem constant byte address 0x4 - core index']
  #allocation1 [shape = 'u32[144,128]{1,0:T(1,128)}', space=vmem, size = 0x12000, scoped, tag = 'internal scratch']
  %s0 = inlined_call_operand.hbm [shape: f32[16,32], index: 0, kind: input, shape index: {}]
  %s1 = inlined_call_operand.hbm [shape: f32[32,32], index: 1, kind: input, shape index: {}]
  %s2 = inlined_call_operand.vmem [shape: f32[1,32], index: 2, kind: input, shape index: {}]
  %s3 = inlined_call_operand.hbm [shape: f32[16,32], index: 3, kind: output, shape index: {}]
  %s4 = sld [smem:[#allocation0]]
  $region30: #{tpu_custom_call.1} parent=0
    _
  %s6 = ssub.s32 1, %s4
  %s7 = scalar_select 0, %s6, %s4
  $region1: #{tpu_custom_call.1} parent=0
    #allocation2 [shape = 'u8[8192]{0}', space=vmem, size = 0x2000, scoped, tag = 'input window, operand 0, single buffered']
    #allocation3 [shape = 's32[1]{0}', space=sflag, size = 0x4, scoped, tag = 'scoped memory for tpu_custom_call.1']
    #allocation4 [shape = 's32[1]{0}', space=sflag, size = 0x4, scoped, tag = 'scoped memory for tpu_custom_call.1']
    #allocation5 [shape = 'u8[16384]{0}', space=vmem, size = 0x4000, scoped, tag = 'input window, operand 1, single buffered']
    #allocation6 [shape = 's32[1]{0}', space=sflag, size = 0x4, scoped, tag = 'scoped memory for tpu_custom_call.1']
    #allocation7 [shape = 'u8[8192]{0}', space=vmem, size = 0x2000, scoped, tag = 'output window, operand 0, single buffered']
    %8 = vsyncpa [#allocation3], 0
    %9 = vsyncpa [#allocation6], 0
    %10 = vsyncpa [#allocation4], 0
    // Predicated region
    $region2: #{tpu_custom_call.1} parent=1 // pred_check
      _
    $region3: #{tpu_custom_call.1} parent=1 // pred_check_branch
      %12 = sbr.rel (0) target = $region5
    $region4: #{tpu_custom_call.1} parent=1 // pred_region
      %s14 = ssub.s32 256, 256
      %15 = vsyncadd [#allocation3], %s14
      %s16 = sshll.u32 [#allocation2], 4
      %s17 = int_to_ptr.vmem [resolvable:$true] %s16
      %22 = dma.hbm_to_vmem [thread:$0]  %s0, 256, %s17, [#allocation3], 128, 128, 8
    $region5: #{tpu_custom_call.1} parent=1 // pred_fallthru
      _
    // Predicated region
    $region6: #{tpu_custom_call.1} parent=1 // pred_check
      _
    $region7: #{tpu_custom_call.1} parent=1 // pred_check_branch
      %24 = sbr.rel (0) target = $region9
    $region8: #{tpu_custom_call.1} parent=1 // pred_region
      %s26 = ssub.s32 512, 512
      %27 = vsyncadd [#allocation6], %s26
      %s28 = sshll.u32 [#allocation5], 4
      %s29 = int_to_ptr.vmem [resolvable:$true] %s28
      %34 = dma.hbm_to_vmem [thread:$0]  %s1, 512, %s29, [#allocation6], 128, 128, 8
    $region9: #{tpu_custom_call.1} parent=1 // pred_fallthru
      _
    // Predicated region
    $region10: #{tpu_custom_call.1} parent=1 // pred_check
      _
    $region11: #{tpu_custom_call.1} parent=1 // pred_check_branch
      %36 = sbr.rel (0) target = $region13
    $region12: #{tpu_custom_call.1} parent=1 // pred_region
      _
    $region13: #{tpu_custom_call.1} parent=1 // pred_fallthru
      _
    // Predicated region
    $region14: #{tpu_custom_call.1} parent=1 // pred_check
      _
    $region15: #{tpu_custom_call.1} parent=1 // pred_check_branch
      %38 = sbr.rel (0) target = $region17
    $region16: #{tpu_custom_call.1} parent=1 // pred_region
      %39 = dma.done [#allocation3], 256
    $region17: #{tpu_custom_call.1} parent=1 // pred_fallthru
      _
    // Predicated region
    $region18: #{tpu_custom_call.1} parent=1 // pred_check
      _
    $region19: #{tpu_custom_call.1} parent=1 // pred_check_branch
      %41 = sbr.rel (0) target = $region21
    $region20: #{tpu_custom_call.1} parent=1 // pred_region
      %42 = dma.done [#allocation6], 512
    $region21: #{tpu_custom_call.1} parent=1 // pred_fallthru
      _
    %v43 = vld [vmem:[#allocation2] sm:$0xff]
    %v44 = vld [vmem:[#allocation2 + $0x8] sm:$0xff]
    %v45 = vld [vmem:[#allocation5] sm:$0xff]
    %v46 = vld [vmem:[#allocation5 + $0x8] sm:$0xff]
    %v47 = vld [vmem:[#allocation5 + $0x10] sm:$0xff]
    %v48 = vld [vmem:[#allocation5 + $0x18] sm:$0xff]
    %v49 = vld [vmem:[%s2] sm:$0x1]
    %v51 = vlaneseq
    %v52 = vshrl.u32 %v51, 7
    %v53 = vsub.s32 0, %v52
    %v54 = vrot.slane %v49, %v53
    %vm56 = vcmask 261120
    %v58 = vsel %vm56, %v43, 0
    %v61 = vsel %vm56, %v44, 0
    %63 = vmatprep.subr.mxu0 0.0
    %64 = vmatpush1.msra.mxu0 0.0
    %65 = vmatprep.subr.mxu0 0.0
    %66 = vmatpush1.msra.mxu0 0.0
    %67 = vmatprep.subr.mxu0 0.0
    %68 = vmatpush1.msra.mxu0 0.0
    %69 = vmatprep.subr.mxu0 0.0
    %70 = vmatpush1.msra.mxu0 0.0
    %71 = vmatprep.subr.mxu0 0.0
    %72 = vmatpush1.msra.mxu0 0.0
    %73 = vmatprep.subr.mxu0 0.0
    %74 = vmatpush1.msra.mxu0 0.0
    %75 = vmatprep.subr.mxu0 0.0
    %76 = vmatpush1.msra.mxu0 0.0
    %77 = vmatprep.subr.mxu0 0.0
    %78 = vmatpush1.msra.mxu0 0.0
    %79 = vmatprep.subr.mxu0 0.0
    %80 = vmatpush1.msra.mxu0 0.0
    %81 = vmatprep.subr.mxu0 0.0
    %82 = vmatpush1.msra.mxu0 0.0
    %83 = vmatprep.subr.mxu0 0.0
    %84 = vmatpush1.msra.mxu0 0.0
    %85 = vmatprep.subr.mxu0 0.0
    %86 = vmatpush1.msra.mxu0 0.0
    %87 = vmatprep.subr.mxu0 0.0
    %88 = vmatpush1.msra.mxu0 %v48
    %89 = vmatprep.subr.mxu0 0.0
    %90 = vmatpush1.msra.mxu0 %v47
    %91 = vmatprep.subr.mxu0 0.0
    %92 = vmatpush1.msra.mxu0 %v46
    %93 = vmatprep.subr.mxu0 0.0
    %94 = vmatpush1.msra.mxu0 %v45
    %95 = vmatprep.subr.mxu0 0.0
    %96 = vmatpush2.msra.mxu0 0.0
    %97 = vmatprep.subr.mxu0 0.0
    %98 = vmatpush2.msra.mxu0 0.0
    %99 = vmatprep.subr.mxu0 0.0
    %100 = vmatpush2.msra.mxu0 0.0
    %101 = vmatprep.subr.mxu0 0.0
    %102 = vmatpush2.msra.mxu0 0.0
    %103 = vmatprep.subr.mxu0 0.0
    %104 = vmatpush2.msra.mxu0 0.0
    %105 = vmatprep.subr.mxu0 0.0
    %106 = vmatpush2.msra.mxu0 0.0
    %107 = vmatprep.subr.mxu0 0.0
    %108 = vmatpush2.msra.mxu0 0.0
    %109 = vmatprep.subr.mxu0 0.0
    %110 = vmatpush2.msra.mxu0 0.0
    %111 = vmatprep.subr.mxu0 0.0
    %112 = vmatpush2.msra.mxu0 0.0
    %113 = vmatprep.subr.mxu0 0.0
    %114 = vmatpush2.msra.mxu0 0.0
    %115 = vmatprep.subr.mxu0 0.0
    %116 = vmatpush2.msra.mxu0 0.0
    %117 = vmatprep.subr.mxu0 0.0
    %118 = vmatpush2.msra.mxu0 0.0
    %119 = vmatprep.subr.mxu0 0.0
    %120 = vmatpush2.msra.mxu0 0.0
    %121 = vmatprep.subr.mxu0 0.0
    %122 = vmatpush2.msra.mxu0 0.0
    %123 = vmatprep.subr.mxu0 0.0
    %124 = vmatpush2.msra.mxu0 0.0
    %125 = vmatprep.subr.mxu0 0.0
    %126 = vmatpush2.msra.mxu0 0.0
    %127 = vmatprep.mubr.f32.mxu0 0.0
    %128 = vmatmul.mubr.f32.gmra.mxu0 %v58
    %v129 = vpop.f32.mrf.mxu0
    %v130 = vadd.f32 %v54, %v129
    %v131 = vpop.f32.mrf.mxu0
    %132 = vmatprep.mubr.f32.mxu0 0.0
    %133 = vmatmul.mubr.f32.gmra.mxu0 %v61
    %v134 = vpop.f32.mrf.mxu0
    %v135 = vadd.f32 %v54, %v134
    %v136 = vpop.f32.mrf.mxu0
    %137 = vdwg.mxu0
    %v138 = vmax.f32 %v130, 0.0
    %v139 = vmax.f32 %v135, 0.0
    %v140 = vsub.f32 0.0, %v138
    %v141 = vsub.f32 0.0, %v139
    %v142 = vmul.f32 %v140, 1.442695
    %v143 = vpow.pop %v142
    %v144 = vmul.f32 %v141, 1.442695
    %v145 = vpow.pop %v144
    %146 = vst.msk [vmem:[#allocation7] sm:$0xff] %vm56, %v143
    %147 = vst.msk [vmem:[#allocation7 + $0x8] sm:$0xff] %vm56, %v145
    // Predicated region
    $region22: #{tpu_custom_call.1} parent=1 // pred_check
      _
    $region23: #{tpu_custom_call.1} parent=1 // pred_check_branch
      %149 = sbr.rel (0) target = $region25
    $region24: #{tpu_custom_call.1} parent=1 // pred_region
      %s151 = ssub.s32 256, 256
      %152 = vsyncadd [#allocation4], %s151
      %s153 = sshll.u32 [#allocation7], 4
      %s154 = int_to_ptr.vmem [resolvable:$true] %s153
      %159 = dma.vmem_to_hbm [thread:$0]  %s154, 256, %s3, [#allocation4], 128, 128, 8
    $region25: #{tpu_custom_call.1} parent=1 // pred_fallthru
      _
    // Predicated region
    $region26: #{tpu_custom_call.1} parent=1 // pred_check
      _
    $region27: #{tpu_custom_call.1} parent=1 // pred_check_branch
      %161 = sbr.rel (0) target = $region29
    $region28: #{tpu_custom_call.1} parent=1 // pred_region
      %162 = dma.done [#allocation4], 256
    $region29: #{tpu_custom_call.1} parent=1 // pred_fallthru
      _
    %163 = vsyncpa [#allocation3], 1
    %164 = vsyncpa [#allocation6], 1
    %165 = vsyncpa [#allocation4], 1

// kernel: tpu_custom_call.1
$region0: #{tpu_custom_call.1}
  #allocation0 [shape = 'u32[]', space=smem, size = 0x4, offset = 0x4, fixed_abs, tag = 'smem constant byte address 0x4 - core index']
  #allocation1 [shape = 'u32[144,128]{1,0:T(1,128)}', space=vmem, size = 0x12000, scoped, tag = 'internal scratch']
  %s0 = inlined_call_operand.hbm [shape: f32[16,32], index: 0, kind: input, shape index: {}]
  %s1 = inlined_call_operand.hbm [shape: f32[32,32], index: 1, kind: input, shape index: {}]
  %s2 = inlined_call_operand.vmem [shape: f32[1,32], index: 2, kind: input, shape index: {}]
  %s3 = inlined_call_operand.hbm [shape: f32[16,32], index: 3, kind: output, shape index: {}]
  %s4 = sld [smem:[#allocation0]]
  $region30: #{tpu_custom_call.1} parent=0
    _
  %s6 = ssub.s32 1, %s4
  %s7 = scalar_select 0, %s6, %s4
  $region1: #{tpu_custom_call.1} parent=0
    #allocation2 [shape = 'u8[8192]{0}', space=vmem, size = 0x2000, scoped, tag = 'input window, operand 0, single buffered']
    #allocation3 [shape = 's32[1]{0}', space=sflag, size = 0x4, scoped, tag = 'scoped memory for tpu_custom_call.1']
    #allocation4 [shape = 's32[1]{0}', space=sflag, size = 0x4, scoped, tag = 'scoped memory for tpu_custom_call.1']
    #allocation5 [shape = 'u8[16384]{0}', space=vmem, size = 0x4000, scoped, tag = 'input window, operand 1, single buffered']
    #allocation6 [shape = 's32[1]{0}', space=sflag, size = 0x4, scoped, tag = 'scoped memory for tpu_custom_call.1']
    #allocation7 [shape = 'u8[8192]{0}', space=vmem, size = 0x2000, scoped, tag = 'output window, operand 0, single buffered']
    %8 = vsyncpa [#allocation3], 0
    %9 = vsyncpa [#allocation6], 0
    %10 = vsyncpa [#allocation4], 0
    // Predicated region
    $region2: #{tpu_custom_call.1} parent=1 // pred_check
      _
    $region3: #{tpu_custom_call.1} parent=1 // pred_check_branch
      %12 = sbr.rel (0) target = $region5
    $region4: #{tpu_custom_call.1} parent=1 // pred_region
      %s14 = ssub.s32 256, 256
      %15 = vsyncadd [#allocation3], %s14
      %s16 = sshll.u32 [#allocation2], 4
      %s17 = int_to_ptr.vmem [resolvable:$true] %s16
      %22 = dma.hbm_to_vmem [thread:$0]  %s0, 256, %s17, [#allocation3], 128, 128, 8
    $region5: #{tpu_custom_call.1} parent=1 // pred_fallthru
      _
    // Predicated region
    $region6: #{tpu_custom_call.1} parent=1 // pred_check
      _
    $region7: #{tpu_custom_call.1} parent=1 // pred_check_branch
      %24 = sbr.rel (0) target = $region9
    $region8: #{tpu_custom_call.1} parent=1 // pred_region
      %s26 = ssub.s32 512, 512
      %27 = vsyncadd [#allocation6], %s26
      %s28 = sshll.u32 [#allocation5], 4
      %s29 = int_to_ptr.vmem [resolvable:$true] %s28
      %34 = dma.hbm_to_vmem [thread:$0]  %s1, 512, %s29, [#allocation6], 128, 128, 8
    $region9: #{tpu_custom_call.1} parent=1 // pred_fallthru
      _
    // Predicated region
    $region10: #{tpu_custom_call.1} parent=1 // pred_check
      _
    $region11: #{tpu_custom_call.1} parent=1 // pred_check_branch
      %36 = sbr.rel (0) target = $region13
    $region12: #{tpu_custom_call.1} parent=1 // pred_region
      _
    $region13: #{tpu_custom_call.1} parent=1 // pred_fallthru
      _
    // Predicated region
    $region14: #{tpu_custom_call.1} parent=1 // pred_check
      _
    $region15: #{tpu_custom_call.1} parent=1 // pred_check_branch
      %38 = sbr.rel (0) target = $region17
    $region16: #{tpu_custom_call.1} parent=1 // pred_region
      %39 = dma.done [#allocation3], 256
    $region17: #{tpu_custom_call.1} parent=1 // pred_fallthru
      _
    // Predicated region
    $region18: #{tpu_custom_call.1} parent=1 // pred_check
      _
    $region19: #{tpu_custom_call.1} parent=1 // pred_check_branch
      %41 = sbr.rel (0) target = $region21
    $region20: #{tpu_custom_call.1} parent=1 // pred_region
      %42 = dma.done [#allocation6], 512
    $region21: #{tpu_custom_call.1} parent=1 // pred_fallthru
      _
    %v43 = vld [vmem:[#allocation2] sm:$0xff]
    %v44 = vld [vmem:[#allocation2 + $0x8] sm:$0xff]
    %v45 = vld [vmem:[#allocation5] sm:$0xff]
    %v46 = vld [vmem:[#allocation5 + $0x8] sm:$0xff]
    %v47 = vld [vmem:[#allocation5 + $0x10] sm:$0xff]
    %v48 = vld [vmem:[#allocation5 + $0x18] sm:$0xff]
    %v49 = vld [vmem:[%s2] sm:$0x1]
    %v51 = vlaneseq
    %v52 = vshrl.u32 %v51, 7
    %v53 = vsub.s32 0, %v52
    %v54 = vrot.slane %v49, %v53
    %vm56 = vcmask 261120
    %v58 = vsel %vm56, %v43, 0
    %v61 = vsel %vm56, %v44, 0
    %63 = vmatprep.subr.mxu0 0.0
    %64 = vmatpush1.msra.mxu0 0.0
    %65 = vmatprep.subr.mxu0 0.0
    %66 = vmatpush1.msra.mxu0 0.0
    %67 = vmatprep.subr.mxu0 0.0
    %68 = vmatpush1.msra.mxu0 0.0
    %69 = vmatprep.subr.mxu0 0.0
    %70 = vmatpush1.msra.mxu0 0.0
    %71 = vmatprep.subr.mxu0 0.0
    %72 = vmatpush1.msra.mxu0 0.0
    %73 = vmatprep.subr.mxu0 0.0
    %74 = vmatpush1.msra.mxu0 0.0
    %75 = vmatprep.subr.mxu0 0.0
    %76 = vmatpush1.msra.mxu0 0.0
    %77 = vmatprep.subr.mxu0 0.0
    %78 = vmatpush1.msra.mxu0 0.0
    %79 = vmatprep.subr.mxu0 0.0
    %80 = vmatpush1.msra.mxu0 0.0
    %81 = vmatprep.subr.mxu0 0.0
    %82 = vmatpush1.msra.mxu0 0.0
    %83 = vmatprep.subr.mxu0 0.0
    %84 = vmatpush1.msra.mxu0 0.0
    %85 = vmatprep.subr.mxu0 0.0
    %86 = vmatpush1.msra.mxu0 0.0
    %87 = vmatprep.subr.mxu0 0.0
    %88 = vmatpush1.msra.mxu0 %v48
    %89 = vmatprep.subr.mxu0 0.0
    %90 = vmatpush1.msra.mxu0 %v47
    %91 = vmatprep.subr.mxu0 0.0
    %92 = vmatpush1.msra.mxu0 %v46
    %93 = vmatprep.subr.mxu0 0.0
    %94 = vmatpush1.msra.mxu0 %v45
    %95 = vmatprep.subr.mxu0 0.0
    %96 = vmatpush2.msra.mxu0 0.0
    %97 = vmatprep.subr.mxu0 0.0
    %98 = vmatpush2.msra.mxu0 0.0
    %99 = vmatprep.subr.mxu0 0.0
    %100 = vmatpush2.msra.mxu0 0.0
    %101 = vmatprep.subr.mxu0 0.0
    %102 = vmatpush2.msra.mxu0 0.0
    %103 = vmatprep.subr.mxu0 0.0
    %104 = vmatpush2.msra.mxu0 0.0
    %105 = vmatprep.subr.mxu0 0.0
    %106 = vmatpush2.msra.mxu0 0.0
    %107 = vmatprep.subr.mxu0 0.0
    %108 = vmatpush2.msra.mxu0 0.0
    %109 = vmatprep.subr.mxu0 0.0
    %110 = vmatpush2.msra.mxu0 0.0
    %111 = vmatprep.subr.mxu0 0.0
    %112 = vmatpush2.msra.mxu0 0.0
    %113 = vmatprep.subr.mxu0 0.0
    %114 = vmatpush2.msra.mxu0 0.0
    %115 = vmatprep.subr.mxu0 0.0
    %116 = vmatpush2.msra.mxu0 0.0
    %117 = vmatprep.subr.mxu0 0.0
    %118 = vmatpush2.msra.mxu0 0.0
    %119 = vmatprep.subr.mxu0 0.0
    %120 = vmatpush2.msra.mxu0 0.0
    %121 = vmatprep.subr.mxu0 0.0
    %122 = vmatpush2.msra.mxu0 0.0
    %123 = vmatprep.subr.mxu0 0.0
    %124 = vmatpush2.msra.mxu0 0.0
    %125 = vmatprep.subr.mxu0 0.0
    %126 = vmatpush2.msra.mxu0 0.0
    %127 = vmatprep.mubr.f32.mxu0 0.0
    %128 = vmatmul.mubr.f32.gmra.mxu0 %v58
    %v129 = vpop.f32.mrf.mxu0
    %v130 = vadd.f32 %v54, %v129
    %v131 = vpop.f32.mrf.mxu0
    %132 = vmatprep.mubr.f32.mxu0 0.0
    %133 = vmatmul.mubr.f32.gmra.mxu0 %v61
    %v134 = vpop.f32.mrf.mxu0
    %v135 = vadd.f32 %v54, %v134
    %v136 = vpop.f32.mrf.mxu0
    %137 = vdwg.mxu0
    %v138 = vmax.f32 %v130, 0.0
    %v139 = vmax.f32 %v135, 0.0
    %v140 = vsub.f32 0.0, %v138
    %v141 = vsub.f32 0.0, %v139
    %v142 = vmul.f32 %v140, 1.442695
    %v143 = vpow.pop %v142
    %v144 = vmul.f32 %v141, 1.442695
    %v145 = vpow.pop %v144
    %146 = vst.msk [vmem:[#allocation7] sm:$0xff] %vm56, %v143
    %147 = vst.msk [vmem:[#allocation7 + $0x8] sm:$0xff] %vm56, %v145
    // Predicated region
    $region22: #{tpu_custom_call.1} parent=1 // pred_check
      _
    $region23: #{tpu_custom_call.1} parent=1 // pred_check_branch
      %149 = sbr.rel (0) target = $region25
    $region24: #{tpu_custom_call.1} parent=1 // pred_region
      %s151 = ssub.s32 256, 256
      %152 = vsyncadd [#allocation4], %s151
      %s153 = sshll.u32 [#allocation7], 4
      %s154 = int_to_ptr.vmem [resolvable:$true] %s153
      %159 = dma.vmem_to_hbm [thread:$0]  %s154, 256, %s3, [#allocation4], 128, 128, 8
    $region25: #{tpu_custom_call.1} parent=1 // pred_fallthru
      _
    // Predicated region
    $region26: #{tpu_custom_call.1} parent=1 // pred_check
      _
    $region27: #{tpu_custom_call.1} parent=1 // pred_check_branch
      %161 = sbr.rel (0) target = $region29
    $region28: #{tpu_custom_call.1} parent=1 // pred_region
      %162 = dma.done [#allocation4], 256
    $region29: #{tpu_custom_call.1} parent=1 // pred_fallthru
      _
    %163 = vsyncpa [#allocation3], 1
    %164 = vsyncpa [#allocation6], 1
    %165 = vsyncpa [#allocation4], 1

</llo_original>
